<compile_context>
chip_gen: v7x
topology: tpu7x:2x2x1
jax: 0.10.0
libtpu: 0.0.40
codegen_flags: <defaults>
</compile_context>

<pallas_src>
import jax
import jax.numpy as jnp
from jax import lax
from jax.experimental import pallas as pl
from jax.experimental.pallas import tpu as pltpu

_LANE = 128


def _round_up(x, m):
    return (x + m - 1) // m * m


def _vmem_limit_bytes():
    """Scoped VMEM request derived from the device (v5e/v6e ~96MiB, v7x ~48MiB)."""
    cap = 64 * 1024 * 1024
    try:
        info = pltpu.get_tpu_info()
        cap = int(getattr(info, "vmem_capacity_bytes", cap))
    except Exception:
        pass
    return min(cap * 3 // 4, 100 * 1024 * 1024)


def _pick_tile_h(ho, wo, per_row_in, per_row_out, avail):
    """Largest divisor of Ho whose (tile_h*Wo) is lane-legal and fits the budget.

    Lane-legal: tile_h*Wo % 128 == 0 (unmasked, block-aligned stores) or tile_h == Ho
    (block equals the full output spatial dim).  Factor 3 covers the double-buffered
    in/out tiles plus in-kernel temporaries.
    """
    valid = [d for d in range(1, ho + 1)
             if ho % d == 0 and ((d * wo) % _LANE == 0 or d == ho)]
    fitting = [d for d in valid if 3 * d * (per_row_in + per_row_out) <= avail]
    return max(fitting) if fitting else min(valid)


# ----------------------------- kernels ---------------------------------------


def _conv22_kernel(x_ref, w0_ref, w1_ref, o_ref):
    # x_ref: (1, tile_h, 2, Wo, 2C) natural NHWC view; w*: (Cout, 2C);
    # o_ref: (1, Cout, tile_h*Wo)  -> NCHW-native, spatial on lanes.
    _, th, _, wo, k = x_ref.shape
    x0 = x_ref[0, :, 0, :, :].reshape(th * wo, k)      # kh = 0 rows (free merge)
    x1 = x_ref[0, :, 1, :, :].reshape(th * wo, k)      # kh = 1 rows
    dn = (((1,), (1,)), ((), ()))                      # contract last dims (trans_b)
    acc = lax.dot_general(w0_ref[...], x0, dn, preferred_element_type=jnp.float32)
    acc = acc + lax.dot_general(w1_ref[...], x1, dn, preferred_element_type=jnp.float32)
    o_ref[0] = acc.astype(o_ref.dtype)


def _maxpool_kernel(x_ref, w_ref, o_ref):
    # In-kernel 2x2 max-pool on the natural view: max over kh (block axis 2) then
    # max over the kw interleave (lane halves [0:C] vs [C:2C]); then 1x1-conv matmul.
    _, th, _, wo, k2c = x_ref.shape
    c = k2c // 2
    m = jnp.maximum(x_ref[0, :, 0, :, :], x_ref[0, :, 1, :, :])   # (th, Wo, 2C)
    pooled = jnp.maximum(m[:, :, :c], m[:, :, c:])                 # (th, Wo, C)
    feat = pooled.reshape(th * wo, c)
    dn = (((1,), (1,)), ((), ()))
    acc = lax.dot_general(w_ref[...], feat, dn, preferred_element_type=jnp.float32)
    o_ref[0] = acc.astype(o_ref.dtype)


# ----------------------------- wrapper ----------------------------------------


def downsample(x, weight, downsampling, *, input_layout="NCHW", out_layout="NCHW",
               compute_dtype=None):
    """Pallas implementation of DownSample.forward.

    x: (N, C, H, W) for input_layout="NCHW", (N, H, W, C) for "NHWC".
    weight: (Cout, C, 2, 2) for 'StrideConv22', (Cout, C, 1, 1) otherwise.
    Returns (N, Cout, H//2, W//2) (or NHWC if out_layout == "NHWC").
    """
    if downsampling not in ("StrideConv22", "Bilinear", "Bicubic",
                            "AverPooling", "MaxPooling"):
        raise NotImplementedError(f"downsampling mode {downsampling!r} not implemented")

    if input_layout == "NCHW":
        N, C, H, W = x.shape
    elif input_layout == "NHWC":
        N, H, W, C = x.shape
    else:
        raise ValueError(input_layout)
    assert H % 2 == 0 and W % 2 == 0
    Ho, Wo = H // 2, W // 2
    Cout = weight.shape[0]

    out_dtype = x.dtype
    op_dtype = jnp.dtype(compute_dtype) if compute_dtype is not None else jnp.dtype(x.dtype)
    itemsize = op_dtype.itemsize
    out_itemsize = jnp.dtype(out_dtype).itemsize
    sub = {4: 8, 2: 16, 1: 32}.get(itemsize, 8)        # sublane packing of op_dtype

    # ---- input view: at most one layout pass (NCHW -> NHWC, fused with the cast);
    #      NHWC input needs zero passes.  Everything below is a free reshape.
    x_nhwc = jnp.transpose(x, (0, 2, 3, 1)) if input_layout == "NCHW" else x
    if x_nhwc.dtype != op_dtype:
        x_nhwc = x_nhwc.astype(op_dtype)

    Wo_eff = _round_up(Wo, sub)
    if Wo_eff != Wo:
        # Pad W so the in-kernel (tile_h, Wo, 2C)->(tile_h*Wo, 2C) merge stays free;
        # padded output columns are sliced off at the end.
        x_nhwc = jnp.pad(x_nhwc, ((0, 0), (0, 0), (0, 2 * (Wo_eff - Wo)), (0, 0)))
    x4 = x_nhwc.reshape(N, Ho, 2, Wo_eff, 2 * C)       # last dim packs (kw, ci)

    # ---- mode-specific weights ------------------------------------------------
    if downsampling == "MaxPooling":
        kernel = _maxpool_kernel
        w_ops = [weight.reshape(Cout, C).astype(op_dtype)]
        flops = 2 * N * Ho * Wo_eff * C * Cout
    else:
        kernel = _conv22_kernel
        if downsampling == "StrideConv22":
            w22 = weight                                              # (Cout, C, 2, 2)
        else:
            # 2x2 average folded into the 1x1 conv weight (w/4 per tap).
            w22 = jnp.tile(weight.reshape(Cout, C, 1, 1) / 4.0, (1, 1, 2, 2))
        # (co, ci, kh, kw) -> (kh, co, kw*C+ci): lane order matches x4's (kw, ci).
        w_k = jnp.transpose(w22, (2, 0, 3, 1)).reshape(2, Cout, 2 * C).astype(op_dtype)
        w_ops = [w_k[0], w_k[1]]
        flops = 2 * N * Ho * Wo_eff * 4 * C * Cout

    # ---- tiling: VMEM budget minus (double-buffered) weight footprint ----------
    limit = _vmem_limit_bytes()
    lane_k = _round_up(2 * C, _LANE)
    per_row_in = 2 * _round_up(Wo_eff, sub) * lane_k * itemsize
    per_row_out = _round_up(Cout, 8) * Wo_eff * out_itemsize
    wt_vmem = sum(2 * _round_up(w.shape[0], 8) * _round_up(w.shape[1], _LANE) * itemsize
                  for w in w_ops)
    avail = max(limit - wt_vmem - 2 * 1024 * 1024, 4 * 1024 * 1024)
    tile_h = _pick_tile_h(Ho, Wo_eff, per_row_in, per_row_out, avail)

    in_specs = [pl.BlockSpec((1, tile_h, 2, Wo_eff, 2 * C),
                             lambda n, i: (n, i, 0, 0, 0))]
    in_specs += [pl.BlockSpec(w.shape, lambda n, i: (0, 0)) for w in w_ops]
    out_spec = pl.BlockSpec((1, Cout, tile_h * Wo_eff), lambda n, i: (n, 0, i))

    cost = pl.CostEstimate(
        flops=flops, transcendentals=0,
        bytes_accessed=(x4.size * itemsize + sum(w.size for w in w_ops) * itemsize
                        + N * Cout * Ho * Wo_eff * out_itemsize))

    out_flat = pl.pallas_call(
        kernel,
        out_shape=jax.ShapeDtypeStruct((N, Cout, Ho * Wo_eff), out_dtype),
        grid=(N, Ho // tile_h),
        in_specs=in_specs,
        out_specs=out_spec,
        compiler_params=pltpu.CompilerParams(
            dimension_semantics=("parallel", "parallel"),
            vmem_limit_bytes=limit),
        cost_estimate=cost,
    )(x4, *w_ops)

    # Free reshape to NCHW; no output transpose pass for the default layout.
    out = out_flat.reshape(N, Cout, Ho, Wo_eff)
    if Wo_eff != Wo:
        out = out[..., :Wo]
    if out_layout == "NHWC":
        out = jnp.transpose(out, (0, 2, 3, 1))
    return out


_downsample = jax.jit(
    downsample,
    static_argnames=("downsampling", "input_layout", "out_layout", "compute_dtype"))


# ----------------------------- test harness -----------------------------------


def _ref_conv(x, w, strides):
    return lax.conv_general_dilated(
        x, w, window_strides=strides, padding="VALID",
        dimension_numbers=("NCHW", "OIHW", "NCHW"))


if __name__ == "__main__":
    key = jax.random.PRNGKey(0)
    N, C, H, W, Cout = 2, 4, 16, 16, 8
    kx, kw1, kw2 = jax.random.split(key, 3)

    x = jax.random.normal(kx, (N, C, H, W), dtype=jnp.float32)
    w_stride = 0.1 * jax.random.normal(kw1, (Cout, C, 2, 2), dtype=jnp.float32)
    w_1x1 = 0.1 * jax.random.normal(kw2, (Cout, C, 1, 1), dtype=jnp.float32)

    # --- StrideConv22 ---
    out_sc = _downsample(x, w_stride, "StrideConv22")
    ref_sc = _ref_conv(x, w_stride, (2, 2))

    # --- MaxPooling ---
    out_mp = _downsample(x, w_1x1, "MaxPooling")
    pooled_max = lax.reduce_window(
        x, -jnp.inf, lax.max, (1, 1, 2, 2), (1, 1, 2, 2), "VALID")
    ref_mp = _ref_conv(pooled_max, w_1x1, (1, 1))

    # --- AverPooling / Bilinear / Bicubic (all: 2x2 avg + 1x1 conv) ---
    out_ap = _downsample(x, w_1x1, "AverPooling")
    out_bl = _downsample(x, w_1x1, "Bilinear")
    pooled_avg = lax.reduce_window(
        x, 0.0, lax.add, (1, 1, 2, 2), (1, 1, 2, 2), "VALID") / 4.0
    ref_ap = _ref_conv(pooled_avg, w_1x1, (1, 1))

    # --- NHWC fast path: zero layout passes in and out ---
    out_nhwc = _downsample(jnp.transpose(x, (0, 2, 3, 1)), w_stride, "StrideConv22",
                           input_layout="NHWC", out_layout="NHWC")

    # --- bf16 compute (f32 accumulation); also exercises the W-padding path ---
    out_bf16 = _downsample(x, w_stride, "StrideConv22", compute_dtype=jnp.bfloat16)

    jax.block_until_ready((out_sc, out_mp, out_ap, out_bl, out_nhwc, out_bf16))

    assert out_sc.shape == (N, Cout, H // 2, W // 2)
    assert jnp.allclose(out_sc, ref_sc, atol=1e-4, rtol=1e-4)
    assert jnp.allclose(out_mp, ref_mp, atol=1e-4, rtol=1e-4)
    assert jnp.allclose(out_ap, ref_ap, atol=1e-4, rtol=1e-4)
    assert jnp.allclose(out_bl, ref_ap, atol=1e-4, rtol=1e-4)
    assert jnp.allclose(out_nhwc, jnp.transpose(ref_sc, (0, 2, 3, 1)),
                        atol=1e-4, rtol=1e-4)
    assert jnp.allclose(out_bf16, ref_sc, atol=5e-2, rtol=5e-2)

    print("KERNEL_OK")
</pallas_src>

<mosaic_0001>
module attributes {stable_mosaic.version = 11 : i64} {
  func.func @_conv22_kernel(%arg0: i32, %arg1: i32, %arg2: memref<1x8x2x8x8xf32, #tpu.memory_space<vmem>>, %arg3: memref<8x8xf32, #tpu.memory_space<vmem>>, %arg4: memref<8x8xf32, #tpu.memory_space<vmem>>, %arg5: memref<1x8x64xf32, #tpu.memory_space<vmem>>) attributes {dimension_semantics = [#tpu.dimension_semantics<parallel>, #tpu.dimension_semantics<parallel>], iteration_bounds = array<i64: 2, 1>, scalar_prefetch = 0 : i64, scratch_operands = 0 : i64, tpu.core_type = #tpu.core_type<tc>, window_params = [{transform_indices = @transform_0, window_bounds = array<i64: 1, 8, 2, 8, 8>}, {pipeline_mode = #tpu.pipeline_mode<synchronous>, transform_indices = @transform_1, window_bounds = array<i64: 8, 8>}, {pipeline_mode = #tpu.pipeline_mode<synchronous>, transform_indices = @transform_2, window_bounds = array<i64: 8, 8>}, {transform_indices = @transform_3, window_bounds = array<i64: 1, 8, 64>}]} {
    %c0 = arith.constant 0 : index
    %c0_0 = arith.constant 0 : index
    %c0_1 = arith.constant 0 : index
    %c0_2 = arith.constant 0 : index
    %c0_3 = arith.constant 0 : index
    %0 = vector.load %arg2[%c0, %c0_0, %c0_1, %c0_2, %c0_3] : memref<1x8x2x8x8xf32, #tpu.memory_space<vmem>>, vector<1x8x1x8x8xf32>
    %1 = vector.shape_cast %0 : vector<1x8x1x8x8xf32> to vector<8x8x8xf32>
    %2 = vector.shape_cast %1 : vector<8x8x8xf32> to vector<64x8xf32>
    %c0_4 = arith.constant 0 : index
    %c0_5 = arith.constant 0 : index
    %c1 = arith.constant 1 : index
    %c0_6 = arith.constant 0 : index
    %c0_7 = arith.constant 0 : index
    %3 = vector.load %arg2[%c0_4, %c0_5, %c1, %c0_6, %c0_7] : memref<1x8x2x8x8xf32, #tpu.memory_space<vmem>>, vector<1x8x1x8x8xf32>
    %4 = vector.shape_cast %3 : vector<1x8x1x8x8xf32> to vector<8x8x8xf32>
    %5 = vector.shape_cast %4 : vector<8x8x8xf32> to vector<64x8xf32>
    %c0_8 = arith.constant 0 : index
    %c0_9 = arith.constant 0 : index
    %6 = vector.load %arg3[%c0_8, %c0_9] : memref<8x8xf32, #tpu.memory_space<vmem>>, vector<8x8xf32>
    %cst = arith.constant dense<0.000000e+00> : vector<8x64xf32>
    %7 = tpu.matmul %6, %2, %cst {dimension_numbers = #tpu.dot_dimension_numbers<[1], [1], [0], [0], [0, 0, 1, 0], [], []>} : vector<8x8xf32>, vector<64x8xf32>, vector<8x64xf32> -> vector<8x64xf32>
    %c0_10 = arith.constant 0 : index
    %c0_11 = arith.constant 0 : index
    %8 = vector.load %arg4[%c0_10, %c0_11] : memref<8x8xf32, #tpu.memory_space<vmem>>, vector<8x8xf32>
    %cst_12 = arith.constant dense<0.000000e+00> : vector<8x64xf32>
    %9 = tpu.matmul %8, %5, %cst_12 {dimension_numbers = #tpu.dot_dimension_numbers<[1], [1], [0], [0], [0, 0, 1, 0], [], []>} : vector<8x8xf32>, vector<64x8xf32>, vector<8x64xf32> -> vector<8x64xf32>
    %10 = arith.addf %7, %9 : vector<8x64xf32>
    %c0_13 = arith.constant 0 : index
    %c0_14 = arith.constant 0 : index
    %c0_15 = arith.constant 0 : index
    %11 = vector.load %arg5[%c0_13, %c0_14, %c0_15] : memref<1x8x64xf32, #tpu.memory_space<vmem>>, vector<1x8x64xf32>
    %12 = vector.shape_cast %11 : vector<1x8x64xf32> to vector<8x64xf32>
    %13 = vector.shape_cast %10 : vector<8x64xf32> to vector<1x8x64xf32>
    tpu.vector_store %arg5[%c0_13, %c0_14, %c0_15], %13 {strides = array<i32>} : memref<1x8x64xf32, #tpu.memory_space<vmem>>, vector<1x8x64xf32>,
    return
  }
  func.func @transform_0(%arg0: i32, %arg1: i32) -> (i32, i32, i32, i32, i32) {
    %c0_i32 = arith.constant 0 : i32
    %c0_i32_0 = arith.constant 0 : i32
    %c0_i32_1 = arith.constant 0 : i32
    %c0_i32_2 = arith.constant 0 : i32
    return %arg0, %arg1, %c0_i32, %c0_i32_0, %c0_i32_1 : i32, i32, i32, i32, i32
  }
  func.func @transform_1(%arg0: i32, %arg1: i32) -> (i32, i32) {
    %c0_i32 = arith.constant 0 : i32
    %c0_i32_0 = arith.constant 0 : i32
    %c0_i32_1 = arith.constant 0 : i32
    return %c0_i32, %c0_i32_0 : i32, i32
  }
  func.func @transform_2(%arg0: i32, %arg1: i32) -> (i32, i32) {
    %c0_i32 = arith.constant 0 : i32
    %c0_i32_0 = arith.constant 0 : i32
    %c0_i32_1 = arith.constant 0 : i32
    return %c0_i32, %c0_i32_0 : i32, i32
  }
  func.func @transform_3(%arg0: i32, %arg1: i32) -> (i32, i32, i32) {
    %c0_i32 = arith.constant 0 : i32
    %c0_i32_0 = arith.constant 0 : i32
    return %arg0, %c0_i32, %arg1 : i32, i32, i32
  }
}

</mosaic_0001>

<llo_original>
// kernel: downsample.1
$region0: #{downsample.1}
  #allocation0 [shape = 'u32[]', space=smem, size = 0x4, offset = 0x4, fixed_abs, tag = 'smem constant byte address 0x4 - core index']
  #allocation1 [shape = 'u32[144,128]{1,0:T(1,128)}', space=vmem, size = 0x12000, scoped, tag = 'internal scratch']
  %s0 = inlined_call_operand.vmem [shape: f32[2,8,2,8,8], index: 0, kind: input, shape index: {}]
  %s1 = inlined_call_operand.vmem [shape: f32[8,8], index: 1, kind: input, shape index: {}]
  %s2 = inlined_call_operand.vmem [shape: f32[8,8], index: 2, kind: input, shape index: {}]
  %s3 = inlined_call_operand.vmem [shape: f32[2,8,64], index: 3, kind: output, shape index: {}]
  %s4 = sld [smem:[#allocation0]]
  $region45: #{downsample.1} parent=0
    _
  %s6 = ssub.s32 1, %s4
  %s7 = scalar_select 0, %s6, %s4
  loop: start=0, step=1, limit=4
  $region2: #{downsample.1} parent=0 // loop_pre_header
    _
  $region3: #{downsample.1} parent=0 // loop_header
    %s9 = sphi 0, %s13
    %p10 = scmp.ge.s32.totalorder %s9, 4
    %s16 = sphi 0, %s28
    %s17 = sphi 0, %s24
    %s18 = sphi 0, %s16
    %s19 = sphi 0, %s17
    %s20 = sphi 0, %s18
    %s21 = sphi 0, %s19
    %s33 = sphi 0, %s35
    %s36 = sphi 0, %s33
    %s37 = sphi 0, %s36
    %s53 = sphi 0, %s37
    %s57 = sphi 0, %s57
    %s59 = sphi 0, %s57
    %s60 = sphi 0, %s59
    %s74 = sphi 0, %s60
    %s78 = sphi 0, %s78
    %s80 = sphi 0, %s78
    %s81 = sphi 0, %s80
    %s95 = sphi 0, %s81
    %s103 = sphi 0, %s105
    %s106 = sphi 0, %s103
    %s107 = sphi 0, %s106
    %s123 = sphi 0, %s107
  $region4: #{downsample.1} parent=0 // loop_header_branch
    %12 = sbr.rel (%p10) target = $region8
  $region5: #{downsample.1} parent=0 // loop_body
    %s14 = ssub.s32 %s9, 1
    %s15 = ssub.s32 %s9, 2
    %s22 = sadd.s32 1, %s17
    %p23 = scmp.ge.s32.totalorder %s22, 1
    %s24 = scalar_select %p23, 0, %s22
    %s25 = sadd.s32 1, %s16
    %s26 = scalar_select %p23, %s25, %s16
    %p27 = scmp.ge.s32.totalorder %s26, 2
    %s28 = scalar_select %p27, 0, %s26
    %s29 = ssub.s32 %s16, %s28
    %s30 = ssub.s32 %s17, %s24
    %s31 = sor.u32 %s29, %s30
    %p32 = scmp.eq.s32.totalorder %s31, 0
    %s34 = sadd.s32 %s33, 1
    %s35 = scalar_select %p32, %s33, %s34
    %p38 = pneg %p32
    %p39 = scmp.eq.s32.totalorder %s9, 1
    %p40 = por %p38, %p39
    %p41 = scmp.ne.s32.totalorder %s33, %s36
    %p42 = scmp.eq.s32.totalorder %s9, 0
    %p43 = por %p41, %p42
    %p44 = scmp.ne.s32.totalorder %s33, %s36
    %p45 = scmp.eq.s32.totalorder %s14, 1
    %p46 = por %p44, %p45
    %p47 = scmp.ne.s32.totalorder %s36, %s37
    %p48 = scmp.eq.s32.totalorder %s14, 0
    %p49 = por %p47, %p48
    %p50 = scmp.ne.s32.totalorder %s36, %s37
    %p51 = scmp.eq.s32.totalorder %s15, 1
    %p52 = por %p50, %p51
    %p54 = scmp.ne.s32.totalorder %s37, %s53
    %p55 = scmp.eq.s32.totalorder %s15, 0
    %p56 = por %p54, %p55
    %s58 = sadd.s32 %s57, 1
    %p61 = scmp.eq.s32.totalorder %s9, 1
    %p62 = scmp.ne.s32.totalorder %s57, %s59
    %p63 = scmp.eq.s32.totalorder %s9, 0
    %p64 = por %p62, %p63
    %p65 = scmp.ne.s32.totalorder %s57, %s59
    %p66 = scmp.eq.s32.totalorder %s14, 1
    %p67 = por %p65, %p66
    %p68 = scmp.ne.s32.totalorder %s59, %s60
    %p69 = scmp.eq.s32.totalorder %s14, 0
    %p70 = por %p68, %p69
    %p71 = scmp.ne.s32.totalorder %s59, %s60
    %p72 = scmp.eq.s32.totalorder %s15, 1
    %p73 = por %p71, %p72
    %p75 = scmp.ne.s32.totalorder %s60, %s74
    %p76 = scmp.eq.s32.totalorder %s15, 0
    %p77 = por %p75, %p76
    %s79 = sadd.s32 %s78, 1
    %p82 = scmp.eq.s32.totalorder %s9, 1
    %p83 = scmp.ne.s32.totalorder %s78, %s80
    %p84 = scmp.eq.s32.totalorder %s9, 0
    %p85 = por %p83, %p84
    %p86 = scmp.ne.s32.totalorder %s78, %s80
    %p87 = scmp.eq.s32.totalorder %s14, 1
    %p88 = por %p86, %p87
    %p89 = scmp.ne.s32.totalorder %s80, %s81
    %p90 = scmp.eq.s32.totalorder %s14, 0
    %p91 = por %p89, %p90
    %p92 = scmp.ne.s32.totalorder %s80, %s81
    %p93 = scmp.eq.s32.totalorder %s15, 1
    %p94 = por %p92, %p93
    %p96 = scmp.ne.s32.totalorder %s81, %s95
    %p97 = scmp.eq.s32.totalorder %s15, 0
    %p98 = por %p96, %p97
    %s99 = ssub.s32 %s16, %s28
    %s100 = ssub.s32 %s17, %s24
    %s101 = sor.u32 %s99, %s100
    %p102 = scmp.eq.s32.totalorder %s101, 0
    %s104 = sadd.s32 %s103, 1
    %s105 = scalar_select %p102, %s103, %s104
    %p108 = pneg %p102
    %p109 = scmp.eq.s32.totalorder %s9, 1
    %p110 = por %p108, %p109
    %p111 = scmp.ne.s32.totalorder %s103, %s106
    %p112 = scmp.eq.s32.totalorder %s9, 0
    %p113 = por %p111, %p112
    %p114 = scmp.ne.s32.totalorder %s103, %s106
    %p115 = scmp.eq.s32.totalorder %s14, 1
    %p116 = por %p114, %p115
    %p117 = scmp.ne.s32.totalorder %s106, %s107
    %p118 = scmp.eq.s32.totalorder %s14, 0
    %p119 = por %p117, %p118
    %p120 = scmp.ne.s32.totalorder %s106, %s107
    %p121 = scmp.eq.s32.totalorder %s15, 1
    %p122 = por %p120, %p121
    %p124 = scmp.ne.s32.totalorder %s107, %s123
    %p125 = scmp.eq.s32.totalorder %s15, 0
    %p126 = por %p124, %p125
    %p127 = scmp.le.s32.totalorder 1, %s9
    %p128 = scmp.lt.s32.totalorder %s9, 3
    %p129 = pnand %p127, %p128
    %p130 = pneg %p129
    // Predicated region
    $region9: #{downsample.1} parent=5 // pred_check
      _
    $region10: #{downsample.1} parent=5 // pred_check_branch
      %132 = sbr.rel (%p129) target = $region12
    $region11: #{downsample.1} parent=5 // pred_region
      %s133 = ssub.s32 %s9, 1
      // Predicated region
      $region13: #{downsample.1} parent=11 // pred_check
        %p134 = pneg %p70
      $region14: #{downsample.1} parent=11 // pred_check_branch
        %136 = sbr.rel (%p134) target = $region16
      $region15: #{downsample.1} parent=11 // pred_region
        _
      $region16: #{downsample.1} parent=11 // pred_fallthru
        _
      // Predicated region
      $region17: #{downsample.1} parent=11 // pred_check
        %p137 = pneg %p91
      $region18: #{downsample.1} parent=11 // pred_check_branch
        %139 = sbr.rel (%p137) target = $region20
      $region19: #{downsample.1} parent=11 // pred_region
        _
      $region20: #{downsample.1} parent=11 // pred_fallthru
        _
    $region12: #{downsample.1} parent=5 // pred_fallthru
      _
    %p140 = scmp.lt.s32.totalorder %s9, 2
    // Predicated region
    $region21: #{downsample.1} parent=5 // pred_check
      %p141 = pneg %p140
    $region22: #{downsample.1} parent=5 // pred_check_branch
      %143 = sbr.rel (%p141) target = $region24
    $region23: #{downsample.1} parent=5 // pred_region
      // Predicated region
      $region25: #{downsample.1} parent=23 // pred_check
        %p144 = pneg %p43
      $region26: #{downsample.1} parent=23 // pred_check_branch
        %146 = sbr.rel (%p144) target = $region28
      $region27: #{downsample.1} parent=23 // pred_region
        %s147 = smul.u32 8, %s17
        %p148 = scmp.lt.s32.totalorder %s16, 1
        %s149 = scalar_select %p148, %s16, 1
        %p150 = scmp.lt.s32.totalorder %s147, 7
        %s151 = scalar_select %p150, %s147, 7
        %s152 = smul.addr %s151, 2
        %s153 = smul.addr %s149, 16
        %s154 = sadd.s32 %s152, %s153
        %s155 = smul.addr %s154, 8
        %s156 = scalar_lea.vmem %s0, %s155
        %s157 = smul.u32 8, %s17
      $region28: #{downsample.1} parent=23 // pred_fallthru
        _
    $region24: #{downsample.1} parent=5 // pred_fallthru
      _
    %p158 = scmp.le.s32.totalorder 1, %s9
    %p159 = scmp.lt.s32.totalorder %s9, 3
    %p160 = pnand %p158, %p159
    %p161 = pneg %p160
    // Predicated region
    $region29: #{downsample.1} parent=5 // pred_check
      _
    $region30: #{downsample.1} parent=5 // pred_check_branch
      %163 = sbr.rel (%p160) target = $region32
    $region31: #{downsample.1} parent=5 // pred_region
      %s164 = ssub.s32 %s9, 1
      %s165 = smul.u32 8, %s19
      %p166 = scmp.lt.s32.totalorder %s18, 1
      %s167 = scalar_select %p166, %s18, 1
      %p168 = scmp.lt.s32.totalorder %s165, 7
      %s169 = scalar_select %p168, %s165, 7
      %s170 = smul.addr %s169, 2
      %s171 = smul.addr %s167, 16
      %s172 = sadd.s32 %s170, %s171
      %s173 = smul.addr %s172, 8
      %s174 = scalar_lea.vmem %s0, %s173
      %p175 = pneg %p49
      %p176 = pneg %p46
      %p177 = pneg %p70
      %p178 = pneg %p67
      %p179 = pneg %p91
      %p180 = pneg %p88
      %p181 = pneg %p119
      %p182 = pneg %p116
      %p183 = scmp.lt.s32.totalorder %s18, 1
      %s184 = scalar_select %p183, %s18, 1
      %p185 = scmp.lt.s32.totalorder %s19, 0
      %s186 = scalar_select %p185, %s19, 0
      %s187 = sadd.s32 %s186, %s184
      %s188 = smul.addr %s187, 8
      %s189 = scalar_lea.vmem %s3, %s188
      %s190 = smul.u32 8, %s19
      %p191 = scmp.lt.s32.totalorder %s18, 1
      %s192 = scalar_select %p191, %s18, 1
      %p193 = scmp.lt.s32.totalorder %s190, 7
      %s194 = scalar_select %p193, %s190, 7
      %s195 = smul.addr %s194, 2
      %s196 = smul.addr %s192, 16
      %s197 = sadd.s32 %s195, %s196
      %s198 = smul.addr %s197, 8
      %s199 = scalar_lea.vmem %s0, %s198
      %s200 = smul.u32 8, %s19
      %p201 = scmp.lt.s32.totalorder %s18, 1
      %s202 = scalar_select %p201, %s18, 1
      %p203 = scmp.lt.s32.totalorder %s19, 0
      %s204 = scalar_select %p203, %s19, 0
      %s205 = sadd.s32 %s204, %s202
      %s206 = smul.addr %s205, 8
      %s207 = scalar_lea.vmem %s3, %s206
      %v208 = vld [vmem:[%s199] sm:$0xff]
      %v209 = vld [vmem:[%s199 + $0x10] sm:$0xff]
      %v210 = vld [vmem:[%s199 + $0x20] sm:$0xff]
      %v211 = vld [vmem:[%s199 + $0x30] sm:$0xff]
      %v212 = vld [vmem:[%s199 + $0x40] sm:$0xff]
      %v213 = vld [vmem:[%s199 + $0x50] sm:$0xff]
      %v214 = vld [vmem:[%s199 + $0x60] sm:$0xff]
      %v215 = vld [vmem:[%s199 + $0x70] sm:$0xff]
      %s216 = scalar_lea.vmem %s199, 8
      %v217 = vld [vmem:[%s216] sm:$0xff]
      %v218 = vld [vmem:[%s216 + $0x10] sm:$0xff]
      %v219 = vld [vmem:[%s216 + $0x20] sm:$0xff]
      %v220 = vld [vmem:[%s216 + $0x30] sm:$0xff]
      %v221 = vld [vmem:[%s216 + $0x40] sm:$0xff]
      %v222 = vld [vmem:[%s216 + $0x50] sm:$0xff]
      %v223 = vld [vmem:[%s216 + $0x60] sm:$0xff]
      %v224 = vld [vmem:[%s216 + $0x70] sm:$0xff]
      %v225 = vld [vmem:[%s1] sm:$0xff]
      %v226 = vld [vmem:[%s2] sm:$0xff]
      %vm227 = vcmask 64512
      %v229 = vsel %vm227, %v226, 0
      %v232 = vsel %vm227, %v217, 0
      %v235 = vsel %vm227, %v218, 0
      %v238 = vsel %vm227, %v219, 0
      %v241 = vsel %vm227, %v220, 0
      %v244 = vsel %vm227, %v221, 0
      %v247 = vsel %vm227, %v222, 0
      %v250 = vsel %vm227, %v223, 0
      %v253 = vsel %vm227, %v224, 0
      %255 = vmatprep.subr.mxu0 0.0
      %256 = vmatpush1.xpose.msra.mxu0 %v232
      %257 = vmatprep.subr.mxu0 0.0
      %258 = vmatpush1.xpose.msra.mxu0 %v235
      %259 = vmatprep.subr.mxu0 0.0
      %260 = vmatpush1.xpose.msra.mxu0 %v238
      %261 = vmatprep.subr.mxu0 0.0
      %262 = vmatpush1.xpose.msra.mxu0 %v241
      %263 = vmatprep.subr.mxu0 0.0
      %264 = vmatpush1.xpose.msra.mxu0 %v244
      %265 = vmatprep.subr.mxu0 0.0
      %266 = vmatpush1.xpose.msra.mxu0 %v247
      %267 = vmatprep.subr.mxu0 0.0
      %268 = vmatpush1.xpose.msra.mxu0 %v250
      %269 = vmatprep.subr.mxu0 0.0
      %270 = vmatpush1.xpose.msra.mxu0 %v253
      %271 = vmatprep.subr.mxu0 0.0
      %272 = vmatpush1.xpose.msra.mxu0 0.0
      %273 = vmatprep.subr.mxu0 0.0
      %274 = vmatpush1.xpose.msra.mxu0 0.0
      %275 = vmatprep.subr.mxu0 0.0
      %276 = vmatpush1.xpose.msra.mxu0 0.0
      %277 = vmatprep.subr.mxu0 0.0
      %278 = vmatpush1.xpose.msra.mxu0 0.0
      %279 = vmatprep.subr.mxu0 0.0
      %280 = vmatpush1.xpose.msra.mxu0 0.0
      %281 = vmatprep.subr.mxu0 0.0
      %282 = vmatpush1.xpose.msra.mxu0 0.0
      %283 = vmatprep.subr.mxu0 0.0
      %284 = vmatpush1.xpose.msra.mxu0 0.0
      %285 = vmatprep.subr.mxu0 0.0
      %286 = vmatpush1.xpose.msra.mxu0 0.0
      %287 = vmatprep.subr.mxu0 0.0
      %288 = vmatpush1.xpose.msra.mxu0 0.0
      %289 = vmatprep.subr.mxu0 0.0
      %290 = vmatpush1.xpose.msra.mxu0 0.0
      %291 = vmatprep.subr.mxu0 0.0
      %292 = vmatpush1.xpose.msra.mxu0 0.0
      %293 = vmatprep.subr.mxu0 0.0
      %294 = vmatpush1.xpose.msra.mxu0 0.0
      %295 = vmatprep.subr.mxu0 0.0
      %296 = vmatpush1.xpose.msra.mxu0 0.0
      %297 = vmatprep.subr.mxu0 0.0
      %298 = vmatpush1.xpose.msra.mxu0 0.0
      %299 = vmatprep.subr.mxu0 0.0
      %300 = vmatpush1.xpose.msra.mxu0 0.0
      %301 = vmatprep.subr.mxu0 0.0
      %302 = vmatpush1.xpose.msra.mxu0 0.0
      %303 = vmatprep.subr.mxu0 0.0
      %304 = vmatpush1.xpose.msra.mxu0 0.0
      %305 = vmatprep.subr.mxu0 0.0
      %306 = vmatpush1.xpose.msra.mxu0 0.0
      %307 = vmatprep.subr.mxu0 0.0
      %308 = vmatpush1.xpose.msra.mxu0 0.0
      %309 = vmatprep.subr.mxu0 0.0
      %310 = vmatpush1.xpose.msra.mxu0 0.0
      %311 = vmatprep.subr.mxu0 0.0
      %312 = vmatpush1.xpose.msra.mxu0 0.0
      %313 = vmatprep.subr.mxu0 0.0
      %314 = vmatpush1.xpose.msra.mxu0 0.0
      %315 = vmatprep.subr.mxu0 0.0
      %316 = vmatpush1.xpose.msra.mxu0 0.0
      %317 = vmatprep.subr.mxu0 0.0
      %318 = vmatpush1.xpose.msra.mxu0 0.0
      %319 = vmatprep.mubr.f32.mxu0 0.0
      %320 = vmatmul.mubr.f32.gmra.mrb[0].mxu0 %v229
      %v321 = vpop.f32.mrb[0].mxu0
      %v322 = vadd.f32 0.0, %v321
      %v323 = vpop.f32.mrb[0].mxu0
      %324 = vdwg.mxu0
      %v326 = vsel %vm227, %v225, 0
      %v329 = vsel %vm227, %v208, 0
      %v332 = vsel %vm227, %v209, 0
      %v335 = vsel %vm227, %v210, 0
      %v338 = vsel %vm227, %v211, 0
      %v341 = vsel %vm227, %v212, 0
      %v344 = vsel %vm227, %v213, 0
      %v347 = vsel %vm227, %v214, 0
      %v350 = vsel %vm227, %v215, 0
      %352 = vmatprep.subr.mxu0 0.0
      %353 = vmatpush1.xpose.msra.mxu0 %v329
      %354 = vmatprep.subr.mxu0 0.0
      %355 = vmatpush1.xpose.msra.mxu0 %v332
      %356 = vmatprep.subr.mxu0 0.0
      %357 = vmatpush1.xpose.msra.mxu0 %v335
      %358 = vmatprep.subr.mxu0 0.0
      %359 = vmatpush1.xpose.msra.mxu0 %v338
      %360 = vmatprep.subr.mxu0 0.0
      %361 = vmatpush1.xpose.msra.mxu0 %v341
      %362 = vmatprep.subr.mxu0 0.0
      %363 = vmatpush1.xpose.msra.mxu0 %v344
      %364 = vmatprep.subr.mxu0 0.0
      %365 = vmatpush1.xpose.msra.mxu0 %v347
      %366 = vmatprep.subr.mxu0 0.0
      %367 = vmatpush1.xpose.msra.mxu0 %v350
      %368 = vmatprep.subr.mxu0 0.0
      %369 = vmatpush1.xpose.msra.mxu0 0.0
      %370 = vmatprep.subr.mxu0 0.0
      %371 = vmatpush1.xpose.msra.mxu0 0.0
      %372 = vmatprep.subr.mxu0 0.0
      %373 = vmatpush1.xpose.msra.mxu0 0.0
      %374 = vmatprep.subr.mxu0 0.0
      %375 = vmatpush1.xpose.msra.mxu0 0.0
      %376 = vmatprep.subr.mxu0 0.0
      %377 = vmatpush1.xpose.msra.mxu0 0.0
      %378 = vmatprep.subr.mxu0 0.0
      %379 = vmatpush1.xpose.msra.mxu0 0.0
      %380 = vmatprep.subr.mxu0 0.0
      %381 = vmatpush1.xpose.msra.mxu0 0.0
      %382 = vmatprep.subr.mxu0 0.0
      %383 = vmatpush1.xpose.msra.mxu0 0.0
      %384 = vmatprep.subr.mxu0 0.0
      %385 = vmatpush1.xpose.msra.mxu0 0.0
      %386 = vmatprep.subr.mxu0 0.0
      %387 = vmatpush1.xpose.msra.mxu0 0.0
      %388 = vmatprep.subr.mxu0 0.0
      %389 = vmatpush1.xpose.msra.mxu0 0.0
      %390 = vmatprep.subr.mxu0 0.0
      %391 = vmatpush1.xpose.msra.mxu0 0.0
      %392 = vmatprep.subr.mxu0 0.0
      %393 = vmatpush1.xpose.msra.mxu0 0.0
      %394 = vmatprep.subr.mxu0 0.0
      %395 = vmatpush1.xpose.msra.mxu0 0.0
      %396 = vmatprep.subr.mxu0 0.0
      %397 = vmatpush1.xpose.msra.mxu0 0.0
      %398 = vmatprep.subr.mxu0 0.0
      %399 = vmatpush1.xpose.msra.mxu0 0.0
      %400 = vmatprep.subr.mxu0 0.0
      %401 = vmatpush1.xpose.msra.mxu0 0.0
      %402 = vmatprep.subr.mxu0 0.0
      %403 = vmatpush1.xpose.msra.mxu0 0.0
      %404 = vmatprep.subr.mxu0 0.0
      %405 = vmatpush1.xpose.msra.mxu0 0.0
      %406 = vmatprep.subr.mxu0 0.0
      %407 = vmatpush1.xpose.msra.mxu0 0.0
      %408 = vmatprep.subr.mxu0 0.0
      %409 = vmatpush1.xpose.msra.mxu0 0.0
      %410 = vmatprep.subr.mxu0 0.0
      %411 = vmatpush1.xpose.msra.mxu0 0.0
      %412 = vmatprep.subr.mxu0 0.0
      %413 = vmatpush1.xpose.msra.mxu0 0.0
      %414 = vmatprep.subr.mxu0 0.0
      %415 = vmatpush1.xpose.msra.mxu0 0.0
      %416 = vmatprep.mubr.f32.mxu0 0.0
      %417 = vmatmul.mubr.f32.gmra.mrb[0].mxu0 %v326
      %v418 = vpop.f32.mrb[0].mxu0
      %v419 = vadd.f32 %v322, %v418
      %v420 = vpop.f32.mrb[0].mxu0
      %421 = vdwg.mxu0
      %vm422 = vcmask 523264
      %423 = vst.msk [vmem:[%s207] sm:$0xff] %vm422, %v419
      %p424 = scmp.lt.s32.totalorder %s18, 1
      %s425 = scalar_select %p424, %s18, 1
      %p426 = scmp.lt.s32.totalorder %s19, 0
      %s427 = scalar_select %p426, %s19, 0
      %s428 = sadd.s32 %s427, %s425
      %s429 = smul.addr %s428, 8
      %s430 = scalar_lea.vmem %s3, %s429
      // Predicated region
      $region33: #{downsample.1} parent=31 // pred_check
        %p431 = pneg %p116
      $region34: #{downsample.1} parent=31 // pred_check_branch
        %433 = sbr.rel (%p431) target = $region36
      $region35: #{downsample.1} parent=31 // pred_region
        _
      $region36: #{downsample.1} parent=31 // pred_fallthru
        _
    $region32: #{downsample.1} parent=5 // pred_fallthru
      _
    %p434 = scmp.le.s32.totalorder 2, %s9
    // Predicated region
    $region37: #{downsample.1} parent=5 // pred_check
      %p435 = pneg %p434
    $region38: #{downsample.1} parent=5 // pred_check_branch
      %437 = sbr.rel (%p435) target = $region40
    $region39: #{downsample.1} parent=5 // pred_region
      %s438 = ssub.s32 %s9, 2
      // Predicated region
      $region41: #{downsample.1} parent=39 // pred_check
        %p439 = pneg %p122
      $region42: #{downsample.1} parent=39 // pred_check_branch
        %441 = sbr.rel (%p439) target = $region44
      $region43: #{downsample.1} parent=39 // pred_region
        %p442 = scmp.lt.s32.totalorder %s20, 1
        %s443 = scalar_select %p442, %s20, 1
        %p444 = scmp.lt.s32.totalorder %s21, 0
        %s445 = scalar_select %p444, %s21, 0
        %s446 = sadd.s32 %s445, %s443
        %s447 = smul.addr %s446, 8
        %s448 = scalar_lea.vmem %s3, %s447
      $region44: #{downsample.1} parent=39 // pred_fallthru
        _
    $region40: #{downsample.1} parent=5 // pred_fallthru
      _
  $region6: #{downsample.1} parent=0 // loop_footer
    %s13 = sadd.s32 1, %s9
  $region7: #{downsample.1} parent=0 // loop_footer_branch
    %8 = sbr.rel target = $region3
  $region8: #{downsample.1} parent=0 // loop_exit
    _

</llo_original>
